<compile_context>
chip_gen: v6e
topology: v6e:2x2x1
jax: 0.10.0
libtpu: 0.0.40
codegen_flags: <defaults>
</compile_context>

<pallas_src>
import functools

import jax
import jax.numpy as jnp
from jax import lax
from jax.experimental import pallas as pl
from jax.experimental.pallas import tpu as pltpu

OUT_W = 128              # lane-dense packed output width
DEFAULT_MAX_TILE = 2048  # max batch-tile rows


def _round_up(n, m):
    return ((n + m - 1) // m) * m


def _choose_batch_tile(batch, max_tile=DEFAULT_MAX_TILE):
    """Pick the batch tile: minimize padding waste, give >=2 grid steps on
    mid/large batches (v7x megacore), cap at max_tile for VMEM."""
    b8 = _round_up(batch, 8)
    if b8 < 128:
        return b8, b8                                   # tiny batch: single tile
    if b8 <= 2 * max_tile:
        bt = _round_up((b8 + 1) // 2, 16)               # exactly 2 grid steps
        return bt, _round_up(b8, bt)
    best_key, best_bt = None, max_tile
    for cand in (max_tile, max_tile // 2, max_tile // 4, 256, 128):
        waste = _round_up(b8, cand) - b8
        key = (waste, -cand)
        if best_key is None or key < best_key:
            best_key, best_bt = key, cand
    return best_bt, _round_up(b8, best_bt)


def _actor_critic_kernel(x_ref, w1_ref, w2_ref, w3_ref, bias_ref, out_ref, *,
                         num_actions, h1, h2):
    bias = bias_ref[...]                                # [8, BW] f32, rows 0..2 used
    b1 = bias[0:1, :h1]
    b2 = bias[1:2, :h2]
    b3 = bias[2:3, :OUT_W]

    # Fused shared MLP: 3 wide matmuls (bf16 operands, f32 accumulation).
    x = x_ref[...].astype(jnp.bfloat16)                 # f32 in HBM, cast on-chip
    a1 = jnp.maximum(
        jnp.dot(x, w1_ref[...], preferred_element_type=jnp.float32) + b1, 0.0
    ).astype(jnp.bfloat16)                              # [bt, H1p]
    a2 = jnp.maximum(
        jnp.dot(a1, w2_ref[...], preferred_element_type=jnp.float32) + b2, 0.0
    ).astype(jnp.bfloat16)                              # [bt, H2p]
    out3 = jnp.dot(a2, w3_ref[...], preferred_element_type=jnp.float32) + b3
    # out3: [bt, 128] f32; lanes 0..A-1 actor logits, lane A critic value.

    bt, ow = out3.shape
    col = lax.broadcasted_iota(jnp.int32, (bt, ow), 1)
    is_logit = col < num_actions

    # Masked, numerically stable softmax over the full 128-lane vreg.
    logits = jnp.where(is_logit, out3, jnp.float32(-1e30))
    m = jnp.max(logits, axis=-1, keepdims=True)
    z = logits - m
    e = jnp.where(is_logit, jnp.exp(z), 0.0)
    s = jnp.sum(e, axis=-1, keepdims=True)
    pi = e * pl.reciprocal(s, approx=True)              # EUP slot; ~2^-12 rel err

    # entropy = -sum(pi * log pi) = log(s) - sum(e*z)/s  (exact divide)
    ez = jnp.sum(e * z, axis=-1, keepdims=True)
    entropy = jnp.log(s) - ez / s                       # [bt, 1]

    value = out3[:, num_actions:num_actions + 1]        # [bt, 1]

    # bf16 output slab (halves writeback).  value / entropy are split into
    # (hi, lo) bf16 pairs so the wrapper reconstructs them at ~f32 accuracy.
    def _hi_lo(v):
        hi = v.astype(jnp.bfloat16).astype(jnp.float32)
        return hi, v - hi

    v_hi, v_lo = _hi_lo(value)
    e_hi, e_lo = _hi_lo(entropy)

    slab = jnp.where(is_logit, pi, 0.0)
    slab = jnp.where(col == num_actions, v_hi, slab)
    slab = jnp.where(col == num_actions + 1, v_lo, slab)
    slab = jnp.where(col == num_actions + 2, e_hi, slab)
    slab = jnp.where(col == num_actions + 3, e_lo, slab)
    out_ref[...] = slab.astype(out_ref.dtype)


def pack_actor_critic_params(actor_params, critic_params, compute_dtype=jnp.bfloat16):
    """Fuse actor/critic weights into the shared wide matmuls.

    Call ONCE per weight update and reuse the result -- the packing runs as
    device ops and must not sit on the per-forward path.
    """
    (aw1, ab1), (aw2, ab2), (aw3, ab3) = actor_params
    (cw1, cb1), (cw2, cb2), (cw3, cb3) = critic_params

    din = aw1.shape[0]
    h1a, h1c = aw1.shape[1], cw1.shape[1]
    h2a, h2c = aw2.shape[1], cw2.shape[1]
    num_actions = aw3.shape[1]
    assert cw3.shape[1] == 1, "critic head must output a single value"
    assert num_actions + 4 <= OUT_W, (
        f"num_actions={num_actions} does not fit the {OUT_W}-lane packed output")

    h1 = _round_up(h1a + h1c, 128)      # lane-dense fused hidden widths
    h2 = _round_up(h2a + h2c, 128)

    w1 = jnp.zeros((din, h1), jnp.float32)
    w1 = w1.at[:, :h1a].set(aw1).at[:, h1a:h1a + h1c].set(cw1)

    w2 = jnp.zeros((h1, h2), jnp.float32)
    w2 = w2.at[:h1a, :h2a].set(aw2).at[h1a:h1a + h1c, h2a:h2a + h2c].set(cw2)

    w3 = jnp.zeros((h2, OUT_W), jnp.float32)
    w3 = w3.at[:h2a, :num_actions].set(aw3)
    w3 = w3.at[h2a:h2a + h2c, num_actions:num_actions + 1].set(cw3)

    bw = max(h1, h2, OUT_W)             # single packed f32 bias slab
    bias = jnp.zeros((8, bw), jnp.float32)
    bias = bias.at[0, :h1a].set(ab1.reshape(-1)).at[0, h1a:h1a + h1c].set(cb1.reshape(-1))
    bias = bias.at[1, :h2a].set(ab2.reshape(-1)).at[1, h2a:h2a + h2c].set(cb2.reshape(-1))
    bias = bias.at[2, :num_actions].set(ab3.reshape(-1))
    bias = bias.at[2, num_actions:num_actions + 1].set(cb3.reshape(-1))

    return {
        "w1": w1.astype(compute_dtype),
        "w2": w2.astype(compute_dtype),
        "w3": w3.astype(compute_dtype),
        "bias": bias,
        "num_actions": num_actions,
    }


def actor_critic_forward(x, packed, max_tile=DEFAULT_MAX_TILE):
    """Fused ActorCritic forward pass.

    x:      [B, num_inputs] float32
    packed: output of pack_actor_critic_params
    Returns (pi [B, A], value [B, 1], entropy [B]).
    """
    w1, w2, w3, bias = packed["w1"], packed["w2"], packed["w3"], packed["bias"]
    num_actions = packed["num_actions"]
    batch, din = x.shape
    h1, h2 = w1.shape[1], w2.shape[1]

    bt, b_pad = _choose_batch_tile(batch, max_tile)
    if b_pad != batch:
        x = jnp.pad(x, ((0, b_pad - batch), (0, 0)))

    grid = (b_pad // bt,)

    flops = 2 * b_pad * (din * h1 + h1 * h2 + h2 * OUT_W)
    transcendentals = b_pad * (OUT_W + 2)
    bytes_accessed = (
        x.size * 4
        + (w1.size + w2.size + w3.size) * 2
        + bias.size * 4
        + b_pad * OUT_W * 2
    )

    # VMEM budget: double-buffered x/out tiles + resident weights + epilogue temps.
    vmem_est = (
        2 * bt * din * 4
        + 2 * bt * OUT_W * 2
        + 4 * (w1.size + w2.size + w3.size)
        + 8 * bias.size
        + 4 * bt * (h1 + h2) * 4
        + 8 * bt * OUT_W * 4
    )
    vmem_limit = int(min(64 * 1024 * 1024, max(32 * 1024 * 1024, vmem_est)))

    kernel = functools.partial(
        _actor_critic_kernel, num_actions=num_actions, h1=h1, h2=h2)

    out = pl.pallas_call(
        kernel,
        out_shape=jax.ShapeDtypeStruct((b_pad, OUT_W), jnp.bfloat16),
        grid=grid,
        in_specs=[
            pl.BlockSpec((bt, din), lambda i: (i, 0)),   # x tile (pipelined)
            pl.BlockSpec(w1.shape, lambda i: (0, 0)),    # resident fused weights
            pl.BlockSpec(w2.shape, lambda i: (0, 0)),
            pl.BlockSpec(w3.shape, lambda i: (0, 0)),
            pl.BlockSpec(bias.shape, lambda i: (0, 0)),  # packed biases
        ],
        out_specs=pl.BlockSpec((bt, OUT_W), lambda i: (i, 0)),
        compiler_params=pltpu.CompilerParams(
            dimension_semantics=("parallel",),
            vmem_limit_bytes=vmem_limit,
        ),
        cost_estimate=pl.CostEstimate(
            flops=flops,
            transcendentals=transcendentals,
            bytes_accessed=bytes_accessed,
        ),
    )(x, w1, w2, w3, bias)

    out = out[:batch]
    pi = out[:, :num_actions].astype(jnp.float32)
    value = (out[:, num_actions].astype(jnp.float32)
             + out[:, num_actions + 1].astype(jnp.float32))[:, None]
    entropy = (out[:, num_actions + 2].astype(jnp.float32)
               + out[:, num_actions + 3].astype(jnp.float32))
    return pi, value, entropy


# ---------------------------------------------------------------------------
# Reference / test harness
# ---------------------------------------------------------------------------

def _init_linear(key, in_dim, out_dim):
    """Deterministic init mirroring nn.Linear's uniform(-1/sqrt(in), 1/sqrt(in))."""
    kw, kb = jax.random.split(key)
    bound = 1.0 / jnp.sqrt(jnp.float32(in_dim))
    w = jax.random.uniform(kw, (in_dim, out_dim), jnp.float32, -bound, bound)
    b = jax.random.uniform(kb, (1, out_dim), jnp.float32, -bound, bound)
    return w, b


def _init_mlp(key, dims):
    params = []
    keys = jax.random.split(key, len(dims) - 1)
    for i in range(1, len(dims)):
        params.append(_init_linear(keys[i - 1], dims[i - 1], dims[i]))
    return params


def _reference_forward(x, actor_params, critic_params):
    """Pure-JAX reference mirroring the kernel's bf16-matmul / f32-accumulate path."""
    def mlp(h, params):
        for i, (w, b) in enumerate(params):
            h = jnp.dot(h.astype(jnp.bfloat16), w.astype(jnp.bfloat16),
                        preferred_element_type=jnp.float32) + b
            if i != len(params) - 1:
                h = jnp.maximum(h, 0.0)
        return h

    value = mlp(x, critic_params)
    logits = mlp(x, actor_params)
    pi = jax.nn.softmax(logits, axis=-1)
    log_pi = jax.nn.log_softmax(logits, axis=-1)
    entropy = -jnp.sum(pi * log_pi, axis=-1)
    return pi, value, entropy


if __name__ == "__main__":
    # Small shapes consistent with the module:
    #   num_inputs=32, layer_dims=[32, 32], actor_outdim=8, batch=8
    B, num_inputs, actor_outdim = 8, 32, 8
    layer_dims = [32, 32]

    key = jax.random.PRNGKey(0)
    k_x, k_actor, k_critic = jax.random.split(key, 3)

    x = jax.random.normal(k_x, (B, num_inputs), jnp.float32)
    actor_params = _init_mlp(k_actor, [num_inputs, *layer_dims, actor_outdim])
    critic_params = _init_mlp(k_critic, [num_inputs, *layer_dims, 1])

    # Pack weights once (per weight update), jit the forward over x only.
    packed = pack_actor_critic_params(actor_params, critic_params)
    forward = jax.jit(lambda inp: actor_critic_forward(inp, packed))

    pi, value, entropy = forward(x)
    jax.block_until_ready((pi, value, entropy))

    # Cross-check against a pure-JAX reference (same bf16 matmul precision).
    pi_r, value_r, ent_r = _reference_forward(x, actor_params, critic_params)
    assert pi.shape == (B, actor_outdim) and value.shape == (B, 1) and entropy.shape == (B,)
    assert jnp.allclose(pi, pi_r, atol=5e-3), "pi mismatch"
    assert jnp.allclose(value, value_r, atol=5e-3), "value mismatch"
    assert jnp.allclose(entropy, ent_r, atol=5e-3), "entropy mismatch"
    assert jnp.allclose(jnp.sum(pi, axis=-1), 1.0, atol=5e-3), "pi rows do not sum to 1"

    print("KERNEL_OK")
</pallas_src>

<mosaic_0001>
module attributes {stable_mosaic.version = 11 : i64} {
  func.func @_actor_critic_kernel(%arg0: i32, %arg1: memref<8x32xf32, #tpu.memory_space<vmem>>, %arg2: memref<32x128xbf16, #tpu.memory_space<vmem>>, %arg3: memref<128x128xbf16, #tpu.memory_space<vmem>>, %arg4: memref<128x128xbf16, #tpu.memory_space<vmem>>, %arg5: memref<8x128xf32, #tpu.memory_space<vmem>>, %arg6: memref<8x128xbf16, #tpu.memory_space<vmem>>) attributes {dimension_semantics = [#tpu.dimension_semantics<parallel>], iteration_bounds = array<i64: 1>, scalar_prefetch = 0 : i64, scratch_operands = 0 : i64, tpu.core_type = #tpu.core_type<tc>, window_params = [{transform_indices = @transform_0, window_bounds = array<i64: 8, 32>}, {pipeline_mode = #tpu.pipeline_mode<synchronous>, transform_indices = @transform_1, window_bounds = array<i64: 32, 128>}, {pipeline_mode = #tpu.pipeline_mode<synchronous>, transform_indices = @transform_2, window_bounds = array<i64: 128, 128>}, {pipeline_mode = #tpu.pipeline_mode<synchronous>, transform_indices = @transform_3, window_bounds = array<i64: 128, 128>}, {pipeline_mode = #tpu.pipeline_mode<synchronous>, transform_indices = @transform_4, window_bounds = array<i64: 8, 128>}, {transform_indices = @transform_5, window_bounds = array<i64: 8, 128>}]} {
    %c0 = arith.constant 0 : index
    %c0_0 = arith.constant 0 : index
    %0 = vector.load %arg5[%c0, %c0_0] : memref<8x128xf32, #tpu.memory_space<vmem>>, vector<8x128xf32>
    %1 = vector.extract_strided_slice %0 {offsets = [0, 0], sizes = [1, 128], strides = [1, 1]} : vector<8x128xf32> to vector<1x128xf32>
    %2 = vector.extract_strided_slice %0 {offsets = [1, 0], sizes = [1, 128], strides = [1, 1]} : vector<8x128xf32> to vector<1x128xf32>
    %3 = vector.extract_strided_slice %0 {offsets = [2, 0], sizes = [1, 128], strides = [1, 1]} : vector<8x128xf32> to vector<1x128xf32>
    %c0_1 = arith.constant 0 : index
    %c0_2 = arith.constant 0 : index
    %4 = vector.load %arg1[%c0_1, %c0_2] : memref<8x32xf32, #tpu.memory_space<vmem>>, vector<8x32xf32>
    %5 = arith.truncf %4 : vector<8x32xf32> to vector<8x32xbf16>
    %c0_3 = arith.constant 0 : index
    %c0_4 = arith.constant 0 : index
    %6 = vector.load %arg2[%c0_3, %c0_4] : memref<32x128xbf16, #tpu.memory_space<vmem>>, vector<32x128xbf16>
    %cst = arith.constant dense<0.000000e+00> : vector<8x128xf32>
    %7 = tpu.matmul %5, %6, %cst {dimension_numbers = #tpu.dot_dimension_numbers<[1], [0], [0], [1], [0, 0, 1, 1], [], []>} : vector<8x32xbf16>, vector<32x128xbf16>, vector<8x128xf32> -> vector<8x128xf32>
    %8 = vector.broadcast %1 : vector<1x128xf32> to vector<8x128xf32>
    %9 = arith.addf %7, %8 : vector<8x128xf32>
    %cst_5 = arith.constant 0.000000e+00 : f32
    %10 = vector.broadcast %cst_5 : f32 to vector<8x128xf32>
    %11 = arith.maximumf %9, %10 : vector<8x128xf32>
    %12 = arith.truncf %11 : vector<8x128xf32> to vector<8x128xbf16>
    %c0_6 = arith.constant 0 : index
    %c0_7 = arith.constant 0 : index
    %13 = vector.load %arg3[%c0_6, %c0_7] : memref<128x128xbf16, #tpu.memory_space<vmem>>, vector<128x128xbf16>
    %cst_8 = arith.constant dense<0.000000e+00> : vector<8x128xf32>
    %14 = tpu.matmul %12, %13, %cst_8 {dimension_numbers = #tpu.dot_dimension_numbers<[1], [0], [0], [1], [0, 0, 1, 1], [], []>} : vector<8x128xbf16>, vector<128x128xbf16>, vector<8x128xf32> -> vector<8x128xf32>
    %15 = vector.broadcast %2 : vector<1x128xf32> to vector<8x128xf32>
    %16 = arith.addf %14, %15 : vector<8x128xf32>
    %cst_9 = arith.constant 0.000000e+00 : f32
    %17 = vector.broadcast %cst_9 : f32 to vector<8x128xf32>
    %18 = arith.maximumf %16, %17 : vector<8x128xf32>
    %19 = arith.truncf %18 : vector<8x128xf32> to vector<8x128xbf16>
    %c0_10 = arith.constant 0 : index
    %c0_11 = arith.constant 0 : index
    %20 = vector.load %arg4[%c0_10, %c0_11] : memref<128x128xbf16, #tpu.memory_space<vmem>>, vector<128x128xbf16>
    %cst_12 = arith.constant dense<0.000000e+00> : vector<8x128xf32>
    %21 = tpu.matmul %19, %20, %cst_12 {dimension_numbers = #tpu.dot_dimension_numbers<[1], [0], [0], [1], [0, 0, 1, 1], [], []>} : vector<8x128xbf16>, vector<128x128xbf16>, vector<8x128xf32> -> vector<8x128xf32>
    %22 = vector.broadcast %3 : vector<1x128xf32> to vector<8x128xf32>
    %23 = arith.addf %21, %22 : vector<8x128xf32>
    %24 = tpu.iota {dimensions = array<i32: 1>} : vector<8x128xi32>
    %c8_i32 = arith.constant 8 : i32
    %25 = vector.broadcast %c8_i32 : i32 to vector<8x128xi32>
    %26 = arith.cmpi slt, %24, %25 : vector<8x128xi32>
    %cst_13 = arith.constant -1.000000e+30 : f32
    %27 = vector.broadcast %cst_13 : f32 to vector<8x128xf32>
    %28 = arith.select %26, %23, %27 : vector<8x128xi1>, vector<8x128xf32>
    %cst_14 = arith.constant dense<0xFF800000> : vector<8xf32>
    %29 = vector.multi_reduction <maximumf>, %28, %cst_14 [1] : vector<8x128xf32> to vector<8xf32>
    %30 = vector.shape_cast %29 : vector<8xf32> to vector<8x1xf32>
    %31 = vector.broadcast %30 : vector<8x1xf32> to vector<8x128xf32>
    %32 = arith.subf %28, %31 : vector<8x128xf32>
    %33 = math.exp %32 : vector<8x128xf32>
    %cst_15 = arith.constant 0.000000e+00 : f32
    %34 = vector.broadcast %cst_15 : f32 to vector<8x128xf32>
    %35 = arith.select %26, %33, %34 : vector<8x128xi1>, vector<8x128xf32>
    %cst_16 = arith.constant dense<0.000000e+00> : vector<8xf32>
    %36 = vector.multi_reduction <add>, %35, %cst_16 [1] : vector<8x128xf32> to vector<8xf32>
    %37 = vector.shape_cast %36 : vector<8xf32> to vector<8x1xf32>
    %38 = tpu.reciprocal %37 {approx = true} : vector<8x1xf32> -> vector<8x1xf32>
    %39 = vector.broadcast %38 : vector<8x1xf32> to vector<8x128xf32>
    %40 = arith.mulf %35, %39 : vector<8x128xf32>
    %41 = arith.mulf %35, %32 : vector<8x128xf32>
    %cst_17 = arith.constant dense<0.000000e+00> : vector<8xf32>
    %42 = vector.multi_reduction <add>, %41, %cst_17 [1] : vector<8x128xf32> to vector<8xf32>
    %43 = vector.shape_cast %42 : vector<8xf32> to vector<8x1xf32>
    %44 = math.log %37 : vector<8x1xf32>
    %45 = arith.divf %43, %37 : vector<8x1xf32>
    %46 = arith.subf %44, %45 : vector<8x1xf32>
    %47 = vector.extract_strided_slice %23 {offsets = [0, 8], sizes = [8, 1], strides = [1, 1]} : vector<8x128xf32> to vector<8x1xf32>
    %48 = arith.truncf %47 : vector<8x1xf32> to vector<8x1xbf16>
    %49 = arith.extf %48 : vector<8x1xbf16> to vector<8x1xf32>
    %50 = arith.subf %47, %49 : vector<8x1xf32>
    %51 = arith.truncf %46 : vector<8x1xf32> to vector<8x1xbf16>
    %52 = arith.extf %51 : vector<8x1xbf16> to vector<8x1xf32>
    %53 = arith.subf %46, %52 : vector<8x1xf32>
    %cst_18 = arith.constant 0.000000e+00 : f32
    %54 = vector.broadcast %cst_18 : f32 to vector<8x128xf32>
    %55 = arith.select %26, %40, %54 : vector<8x128xi1>, vector<8x128xf32>
    %c8_i32_19 = arith.constant 8 : i32
    %56 = vector.broadcast %c8_i32_19 : i32 to vector<8x128xi32>
    %57 = arith.cmpi eq, %24, %56 : vector<8x128xi32>
    %58 = vector.shape_cast %49 : vector<8x1xf32> to vector<8x1xf32>
    %59 = vector.broadcast %58 : vector<8x1xf32> to vector<8x128xf32>
    %60 = arith.select %57, %59, %55 : vector<8x128xi1>, vector<8x128xf32>
    %c9_i32 = arith.constant 9 : i32
    %61 = vector.broadcast %c9_i32 : i32 to vector<8x128xi32>
    %62 = arith.cmpi eq, %24, %61 : vector<8x128xi32>
    %63 = vector.shape_cast %50 : vector<8x1xf32> to vector<8x1xf32>
    %64 = vector.broadcast %63 : vector<8x1xf32> to vector<8x128xf32>
    %65 = arith.select %62, %64, %60 : vector<8x128xi1>, vector<8x128xf32>
    %c10_i32 = arith.constant 10 : i32
    %66 = vector.broadcast %c10_i32 : i32 to vector<8x128xi32>
    %67 = arith.cmpi eq, %24, %66 : vector<8x128xi32>
    %68 = vector.shape_cast %52 : vector<8x1xf32> to vector<8x1xf32>
    %69 = vector.broadcast %68 : vector<8x1xf32> to vector<8x128xf32>
    %70 = arith.select %67, %69, %65 : vector<8x128xi1>, vector<8x128xf32>
    %c11_i32 = arith.constant 11 : i32
    %71 = vector.broadcast %c11_i32 : i32 to vector<8x128xi32>
    %72 = arith.cmpi eq, %24, %71 : vector<8x128xi32>
    %73 = vector.shape_cast %53 : vector<8x1xf32> to vector<8x1xf32>
    %74 = vector.broadcast %73 : vector<8x1xf32> to vector<8x128xf32>
    %75 = arith.select %72, %74, %70 : vector<8x128xi1>, vector<8x128xf32>
    %76 = arith.truncf %75 : vector<8x128xf32> to vector<8x128xbf16>
    %c0_20 = arith.constant 0 : index
    %c0_21 = arith.constant 0 : index
    %77 = vector.load %arg6[%c0_20, %c0_21] : memref<8x128xbf16, #tpu.memory_space<vmem>>, vector<8x128xbf16>
    tpu.vector_store %arg6[%c0_20, %c0_21], %76 {strides = array<i32>} : memref<8x128xbf16, #tpu.memory_space<vmem>>, vector<8x128xbf16>,
    return
  }
  func.func @transform_0(%arg0: i32) -> (i32, i32) {
    %c0_i32 = arith.constant 0 : i32
    %c0_i32_0 = arith.constant 0 : i32
    return %arg0, %c0_i32 : i32, i32
  }
  func.func @transform_1(%arg0: i32) -> (i32, i32) {
    %c0_i32 = arith.constant 0 : i32
    %c0_i32_0 = arith.constant 0 : i32
    %c0_i32_1 = arith.constant 0 : i32
    return %c0_i32, %c0_i32_0 : i32, i32
  }
  func.func @transform_2(%arg0: i32) -> (i32, i32) {
    %c0_i32 = arith.constant 0 : i32
    %c0_i32_0 = arith.constant 0 : i32
    %c0_i32_1 = arith.constant 0 : i32
    return %c0_i32, %c0_i32_0 : i32, i32
  }
  func.func @transform_3(%arg0: i32) -> (i32, i32) {
    %c0_i32 = arith.constant 0 : i32
    %c0_i32_0 = arith.constant 0 : i32
    %c0_i32_1 = arith.constant 0 : i32
    return %c0_i32, %c0_i32_0 : i32, i32
  }
  func.func @transform_4(%arg0: i32) -> (i32, i32) {
    %c0_i32 = arith.constant 0 : i32
    %c0_i32_0 = arith.constant 0 : i32
    %c0_i32_1 = arith.constant 0 : i32
    return %c0_i32, %c0_i32_0 : i32, i32
  }
  func.func @transform_5(%arg0: i32) -> (i32, i32) {
    %c0_i32 = arith.constant 0 : i32
    %c0_i32_0 = arith.constant 0 : i32
    return %arg0, %c0_i32 : i32, i32
  }
}

</mosaic_0001>

<llo_original>
// kernel: _lambda_.1
$region0: #{_lambda_.1}
  #allocation0 [shape = 'u32[]', space=smem, size = 0x4, offset = 0x4, fixed_abs, tag = 'smem constant byte address 0x4 - core index']
  #allocation1 [shape = 'u32[144,128]{1,0:T(1,128)}', space=vmem, size = 0x12000, scoped, tag = 'internal scratch']
  %s0 = inlined_call_operand.hbm [shape: f32[8,32], index: 0, kind: input, shape index: {}]
  %s1 = inlined_call_operand.hbm [shape: bf16[32,128], index: 1, kind: input, shape index: {}]
  %s2 = inlined_call_operand.hbm [shape: bf16[128,128], index: 2, kind: input, shape index: {}]
  %s3 = inlined_call_operand.hbm [shape: bf16[128,128], index: 3, kind: input, shape index: {}]
  %s4 = inlined_call_operand.hbm [shape: f32[8,128], index: 4, kind: input, shape index: {}]
  %s5 = inlined_call_operand.vmem [shape: bf16[8,128], index: 5, kind: output, shape index: {}]
  %s6 = sld [smem:[#allocation0]]
  $region50: #{_lambda_.1} parent=0
    _
  %s8 = ssub.s32 1, %s6
  %s9 = scalar_select 0, %s8, %s6
  $region1: #{_lambda_.1} parent=0
    #allocation2 [shape = 'u8[4096]{0}', space=vmem, size = 0x1000, scoped, tag = 'input window, operand 0, single buffered']
    #allocation3 [shape = 's32[1]{0}', space=sflag, size = 0x4, scoped, tag = 'scoped memory for _lambda_.1']
    #allocation4 [shape = 'u8[8192]{0}', space=vmem, size = 0x2000, scoped, tag = 'input window, operand 1, single buffered']
    #allocation5 [shape = 's32[1]{0}', space=sflag, size = 0x4, scoped, tag = 'scoped memory for _lambda_.1']
    #allocation6 [shape = 'u8[32768]{0}', space=vmem, size = 0x8000, scoped, tag = 'input window, operand 2, single buffered']
    #allocation7 [shape = 'u8[32768]{0}', space=vmem, size = 0x8000, scoped, tag = 'input window, operand 3, single buffered']
    #allocation8 [shape = 's32[1]{0}', space=sflag, size = 0x4, scoped, tag = 'scoped memory for _lambda_.1']
    #allocation9 [shape = 'u8[4096]{0}', space=vmem, size = 0x1000, scoped, tag = 'input window, operand 4, single buffered']
    %10 = vsyncpa [#allocation3], 0
    %11 = vsyncpa [#allocation5], 0
    %12 = vsyncpa [#allocation8], 0
    // Predicated region
    $region2: #{_lambda_.1} parent=1 // pred_check
      _
    $region3: #{_lambda_.1} parent=1 // pred_check_branch
      %14 = sbr.rel (0) target = $region5
    $region4: #{_lambda_.1} parent=1 // pred_region
      %s16 = ssub.s32 128, 128
      %17 = vsyncadd [#allocation3], %s16
      %s19 = sshll.u32 [#allocation2], 4
      %s20 = int_to_ptr.vmem [resolvable:$true] %s19
      %22 = dma.hbm_to_vmem [thread:$0]  %s0, 128, %s20, [#allocation3]
    $region5: #{_lambda_.1} parent=1 // pred_fallthru
      _
    // Predicated region
    $region6: #{_lambda_.1} parent=1 // pred_check
      _
    $region7: #{_lambda_.1} parent=1 // pred_check_branch
      %24 = sbr.rel (0) target = $region9
    $region8: #{_lambda_.1} parent=1 // pred_region
      %s26 = ssub.s32 256, 256
      %27 = vsyncadd [#allocation5], %s26
      %s28 = sshll.u32 [#allocation4], 4
      %s29 = int_to_ptr.vmem [resolvable:$true] %s28
      %34 = dma.hbm_to_vmem [thread:$0]  %s1, 256, %s29, [#allocation5], 64, 64, 4
    $region9: #{_lambda_.1} parent=1 // pred_fallthru
      _
    // Predicated region
    $region10: #{_lambda_.1} parent=1 // pred_check
      _
    $region11: #{_lambda_.1} parent=1 // pred_check_branch
      %36 = sbr.rel (0) target = $region13
    $region12: #{_lambda_.1} parent=1 // pred_region
      %s38 = ssub.s32 1024, 1024
      %39 = vsyncadd [#allocation5], %s38
      %s40 = sshll.u32 [#allocation6], 4
      %s41 = int_to_ptr.vmem [resolvable:$true] %s40
      %46 = dma.hbm_to_vmem [thread:$0]  %s2, 1024, %s41, [#allocation5], 64, 64, 4
    $region13: #{_lambda_.1} parent=1 // pred_fallthru
      _
    // Predicated region
    $region14: #{_lambda_.1} parent=1 // pred_check
      _
    $region15: #{_lambda_.1} parent=1 // pred_check_branch
      %48 = sbr.rel (0) target = $region17
    $region16: #{_lambda_.1} parent=1 // pred_region
      %s50 = ssub.s32 1024, 1024
      %51 = vsyncadd [#allocation8], %s50
      %s52 = sshll.u32 [#allocation7], 4
      %s53 = int_to_ptr.vmem [resolvable:$true] %s52
      %58 = dma.hbm_to_vmem [thread:$0]  %s3, 1024, %s53, [#allocation8], 64, 64, 4
    $region17: #{_lambda_.1} parent=1 // pred_fallthru
      _
    // Predicated region
    $region18: #{_lambda_.1} parent=1 // pred_check
      _
    $region19: #{_lambda_.1} parent=1 // pred_check_branch
      %60 = sbr.rel (0) target = $region21
    $region20: #{_lambda_.1} parent=1 // pred_region
      %s62 = ssub.s32 128, 128
      %63 = vsyncadd [#allocation8], %s62
      %s65 = sshll.u32 [#allocation9], 4
      %s66 = int_to_ptr.vmem [resolvable:$true] %s65
      %68 = dma.hbm_to_vmem [thread:$0]  %s4, 128, %s66, [#allocation8]
    $region21: #{_lambda_.1} parent=1 // pred_fallthru
      _
    // Predicated region
    $region22: #{_lambda_.1} parent=1 // pred_check
      _
    $region23: #{_lambda_.1} parent=1 // pred_check_branch
      %70 = sbr.rel (0) target = $region25
    $region24: #{_lambda_.1} parent=1 // pred_region
      %71 = dma.done [#allocation3], 128
    $region25: #{_lambda_.1} parent=1 // pred_fallthru
      _
    // Predicated region
    $region26: #{_lambda_.1} parent=1 // pred_check
      _
    $region27: #{_lambda_.1} parent=1 // pred_check_branch
      %73 = sbr.rel (0) target = $region29
    $region28: #{_lambda_.1} parent=1 // pred_region
      %74 = dma.done [#allocation5], 256
    $region29: #{_lambda_.1} parent=1 // pred_fallthru
      _
    // Predicated region
    $region30: #{_lambda_.1} parent=1 // pred_check
      _
    $region31: #{_lambda_.1} parent=1 // pred_check_branch
      %76 = sbr.rel (0) target = $region33
    $region32: #{_lambda_.1} parent=1 // pred_region
      %77 = dma.done [#allocation5], 1024
    $region33: #{_lambda_.1} parent=1 // pred_fallthru
      _
    // Predicated region
    $region34: #{_lambda_.1} parent=1 // pred_check
      _
    $region35: #{_lambda_.1} parent=1 // pred_check_branch
      %79 = sbr.rel (0) target = $region37
    $region36: #{_lambda_.1} parent=1 // pred_region
      %80 = dma.done [#allocation8], 1024
    $region37: #{_lambda_.1} parent=1 // pred_fallthru
      _
    // Predicated region
    $region38: #{_lambda_.1} parent=1 // pred_check
      _
    $region39: #{_lambda_.1} parent=1 // pred_check_branch
      %82 = sbr.rel (0) target = $region41
    $region40: #{_lambda_.1} parent=1 // pred_region
      %83 = dma.done [#allocation8], 128
    $region41: #{_lambda_.1} parent=1 // pred_fallthru
      _
    %v85 = vld [vmem:[#allocation9] sm:$0xff]
    %v86 = vld [vmem:[#allocation2] sm:$0xff]
    %v87 = vpack.c.bf16 %v86, %v86
    %v88 = vld [vmem:[#allocation4] sm:$0xf]
    %v89 = vld [vmem:[#allocation4 + $0x4] sm:$0xf]
    %v90 = vld [vmem:[#allocation4 + $0x8] sm:$0xf]
    %v91 = vld [vmem:[#allocation4 + $0xc] sm:$0xf]
    %v92 = vlaneseq
    %v93 = vshrl.u32 %v92, 7
    %v94 = vsub.s32 0, %v93
    %v95 = vrot.slane %v85, %v94
    %v100 = vunpack.c.l.b16 %v88
    %v101 = vunpack.c.l.b16 %v89
    %v102 = vunpack.c.l.b16 %v90
    %v103 = vunpack.c.l.b16 %v91
    %v104 = vpack.c.b16 %v101, %v100
    %v105 = vpack.c.b16 %v103, %v102
    %vm108 = vcmask 261120
    %v110 = vsel %vm108, %v87, 0
    %112 = vmatprep.subr.bf16.mxu0 0
    %113 = vmatpush1.bf16.msra.mxu0 0
    %114 = vmatprep.subr.bf16.mxu0 0
    %115 = vmatpush1.bf16.msra.mxu0 0
    %116 = vmatprep.subr.bf16.mxu0 0
    %117 = vmatpush1.bf16.msra.mxu0 0
    %118 = vmatprep.subr.bf16.mxu0 0
    %119 = vmatpush1.bf16.msra.mxu0 0
    %120 = vmatprep.subr.bf16.mxu0 0
    %121 = vmatpush1.bf16.msra.mxu0 0
    %122 = vmatprep.subr.bf16.mxu0 0
    %123 = vmatpush1.bf16.msra.mxu0 0
    %124 = vmatprep.subr.bf16.mxu0 0
    %125 = vmatpush1.bf16.msra.mxu0 %v105
    %126 = vmatprep.subr.bf16.mxu0 0
    %127 = vmatpush1.bf16.msra.mxu0 %v104
    %128 = vmatprep.subr.bf16.mxu0 0
    %129 = vmatpush2.bf16.msra.mxu0 0
    %130 = vmatprep.subr.bf16.mxu0 0
    %131 = vmatpush2.bf16.msra.mxu0 0
    %132 = vmatprep.subr.bf16.mxu0 0
    %133 = vmatpush2.bf16.msra.mxu0 0
    %134 = vmatprep.subr.bf16.mxu0 0
    %135 = vmatpush2.bf16.msra.mxu0 0
    %136 = vmatprep.subr.bf16.mxu0 0
    %137 = vmatpush2.bf16.msra.mxu0 0
    %138 = vmatprep.subr.bf16.mxu0 0
    %139 = vmatpush2.bf16.msra.mxu0 0
    %140 = vmatprep.subr.bf16.mxu0 0
    %141 = vmatpush2.bf16.msra.mxu0 0
    %142 = vmatprep.subr.bf16.mxu0 0
    %143 = vmatpush2.bf16.msra.mxu0 0
    %144 = vmatprep.mubr.bf16.mxu0 0
    %145 = vmatmul.mubr.bf16.gmra.mxu0 %v110
    %v146 = vpop.f32.mrf.mxu0
    %v147 = vadd.f32 %v95, %v146
    %v148 = vpop.f32.mrf.mxu0
    %v149 = vpop.f32.mrf.mxu0
    %v150 = vpop.f32.mrf.mxu0
    %151 = vdwg.mxu0
    %v152 = vmax.f32 %v147, 0.0
    %v153 = vpack.c.bf16 %v152, %v152
    %v154 = vld [vmem:[#allocation6] sm:$0xf]
    %v155 = vld [vmem:[#allocation6 + $0x4] sm:$0xf]
    %v156 = vld [vmem:[#allocation6 + $0x8] sm:$0xf]
    %v157 = vld [vmem:[#allocation6 + $0xc] sm:$0xf]
    %v158 = vld [vmem:[#allocation6 + $0x10] sm:$0xf]
    %v159 = vld [vmem:[#allocation6 + $0x14] sm:$0xf]
    %v160 = vld [vmem:[#allocation6 + $0x18] sm:$0xf]
    %v161 = vld [vmem:[#allocation6 + $0x1c] sm:$0xf]
    %v162 = vld [vmem:[#allocation6 + $0x20] sm:$0xf]
    %v163 = vld [vmem:[#allocation6 + $0x24] sm:$0xf]
    %v164 = vld [vmem:[#allocation6 + $0x28] sm:$0xf]
    %v165 = vld [vmem:[#allocation6 + $0x2c] sm:$0xf]
    %v166 = vld [vmem:[#allocation6 + $0x30] sm:$0xf]
    %v167 = vld [vmem:[#allocation6 + $0x34] sm:$0xf]
    %v168 = vld [vmem:[#allocation6 + $0x38] sm:$0xf]
    %v169 = vld [vmem:[#allocation6 + $0x3c] sm:$0xf]
    %v170 = vlaneseq
    %v171 = vshrl.u32 %v170, 7
    %v172 = vsub.s32 1, %v171
    %v173 = vrot.slane %v85, %v172
    %v190 = vunpack.c.l.b16 %v154
    %v191 = vunpack.c.l.b16 %v155
    %v192 = vunpack.c.l.b16 %v156
    %v193 = vunpack.c.l.b16 %v157
    %v194 = vunpack.c.l.b16 %v158
    %v195 = vunpack.c.l.b16 %v159
    %v196 = vunpack.c.l.b16 %v160
    %v197 = vunpack.c.l.b16 %v161
    %v198 = vunpack.c.l.b16 %v162
    %v199 = vunpack.c.l.b16 %v163
    %v200 = vunpack.c.l.b16 %v164
    %v201 = vunpack.c.l.b16 %v165
    %v202 = vunpack.c.l.b16 %v166
    %v203 = vunpack.c.l.b16 %v167
    %v204 = vunpack.c.l.b16 %v168
    %v205 = vunpack.c.l.b16 %v169
    %v206 = vpack.c.b16 %v191, %v190
    %v207 = vpack.c.b16 %v193, %v192
    %v208 = vpack.c.b16 %v195, %v194
    %v209 = vpack.c.b16 %v197, %v196
    %v210 = vpack.c.b16 %v199, %v198
    %v211 = vpack.c.b16 %v201, %v200
    %v212 = vpack.c.b16 %v203, %v202
    %v213 = vpack.c.b16 %v205, %v204
    %222 = vmatprep.subr.bf16.mxu0 0
    %223 = vmatpush1.bf16.msra.mxu0 %v213
    %224 = vmatprep.subr.bf16.mxu0 0
    %225 = vmatpush1.bf16.msra.mxu0 %v212
    %226 = vmatprep.subr.bf16.mxu0 0
    %227 = vmatpush1.bf16.msra.mxu0 %v211
    %228 = vmatprep.subr.bf16.mxu0 0
    %229 = vmatpush1.bf16.msra.mxu0 %v210
    %230 = vmatprep.subr.bf16.mxu0 0
    %231 = vmatpush1.bf16.msra.mxu0 %v209
    %232 = vmatprep.subr.bf16.mxu0 0
    %233 = vmatpush1.bf16.msra.mxu0 %v208
    %234 = vmatprep.subr.bf16.mxu0 0
    %235 = vmatpush1.bf16.msra.mxu0 %v207
    %236 = vmatprep.subr.bf16.mxu0 0
    %237 = vmatpush1.bf16.msra.mxu0 %v206
    %238 = vmatprep.subr.bf16.mxu0 0
    %239 = vmatpush2.bf16.msra.mxu0 0
    %240 = vmatprep.subr.bf16.mxu0 0
    %241 = vmatpush2.bf16.msra.mxu0 0
    %242 = vmatprep.subr.bf16.mxu0 0
    %243 = vmatpush2.bf16.msra.mxu0 0
    %244 = vmatprep.subr.bf16.mxu0 0
    %245 = vmatpush2.bf16.msra.mxu0 0
    %246 = vmatprep.subr.bf16.mxu0 0
    %247 = vmatpush2.bf16.msra.mxu0 0
    %248 = vmatprep.subr.bf16.mxu0 0
    %249 = vmatpush2.bf16.msra.mxu0 0
    %250 = vmatprep.subr.bf16.mxu0 0
    %251 = vmatpush2.bf16.msra.mxu0 0
    %252 = vmatprep.subr.bf16.mxu0 0
    %253 = vmatpush2.bf16.msra.mxu0 0
    %254 = vmatprep.mubr.bf16.mxu0 0
    %255 = vmatmul.mubr.bf16.gmra.mxu0 %v153
    %v256 = vpop.f32.mrf.mxu0
    %v257 = vadd.f32 %v173, %v256
    %v258 = vpop.f32.mrf.mxu0
    %v259 = vpop.f32.mrf.mxu0
    %v260 = vpop.f32.mrf.mxu0
    %261 = vdwg.mxu0
    %v262 = vmax.f32 %v257, 0.0
    %v263 = vpack.c.bf16 %v262, %v262
    %v264 = vld [vmem:[#allocation7] sm:$0xf]
    %v265 = vld [vmem:[#allocation7 + $0x4] sm:$0xf]
    %v266 = vld [vmem:[#allocation7 + $0x8] sm:$0xf]
    %v267 = vld [vmem:[#allocation7 + $0xc] sm:$0xf]
    %v268 = vld [vmem:[#allocation7 + $0x10] sm:$0xf]
    %v269 = vld [vmem:[#allocation7 + $0x14] sm:$0xf]
    %v270 = vld [vmem:[#allocation7 + $0x18] sm:$0xf]
    %v271 = vld [vmem:[#allocation7 + $0x1c] sm:$0xf]
    %v272 = vld [vmem:[#allocation7 + $0x20] sm:$0xf]
    %v273 = vld [vmem:[#allocation7 + $0x24] sm:$0xf]
    %v274 = vld [vmem:[#allocation7 + $0x28] sm:$0xf]
    %v275 = vld [vmem:[#allocation7 + $0x2c] sm:$0xf]
    %v276 = vld [vmem:[#allocation7 + $0x30] sm:$0xf]
    %v277 = vld [vmem:[#allocation7 + $0x34] sm:$0xf]
    %v278 = vld [vmem:[#allocation7 + $0x38] sm:$0xf]
    %v279 = vld [vmem:[#allocation7 + $0x3c] sm:$0xf]
    %v280 = vlaneseq
    %v281 = vshrl.u32 %v280, 7
    %v282 = vsub.s32 2, %v281
    %v283 = vrot.slane %v85, %v282
    %v300 = vunpack.c.l.b16 %v264
    %v301 = vunpack.c.l.b16 %v265
    %v302 = vunpack.c.l.b16 %v266
    %v303 = vunpack.c.l.b16 %v267
    %v304 = vunpack.c.l.b16 %v268
    %v305 = vunpack.c.l.b16 %v269
    %v306 = vunpack.c.l.b16 %v270
    %v307 = vunpack.c.l.b16 %v271
    %v308 = vunpack.c.l.b16 %v272
    %v309 = vunpack.c.l.b16 %v273
    %v310 = vunpack.c.l.b16 %v274
    %v311 = vunpack.c.l.b16 %v275
    %v312 = vunpack.c.l.b16 %v276
    %v313 = vunpack.c.l.b16 %v277
    %v314 = vunpack.c.l.b16 %v278
    %v315 = vunpack.c.l.b16 %v279
    %v316 = vpack.c.b16 %v301, %v300
    %v317 = vpack.c.b16 %v303, %v302
    %v318 = vpack.c.b16 %v305, %v304
    %v319 = vpack.c.b16 %v307, %v306
    %v320 = vpack.c.b16 %v309, %v308
    %v321 = vpack.c.b16 %v311, %v310
    %v322 = vpack.c.b16 %v313, %v312
    %v323 = vpack.c.b16 %v315, %v314
    %332 = vmatprep.subr.bf16.mxu0 0
    %333 = vmatpush1.bf16.msra.mxu0 %v323
    %334 = vmatprep.subr.bf16.mxu0 0
    %335 = vmatpush1.bf16.msra.mxu0 %v322
    %336 = vmatprep.subr.bf16.mxu0 0
    %337 = vmatpush1.bf16.msra.mxu0 %v321
    %338 = vmatprep.subr.bf16.mxu0 0
    %339 = vmatpush1.bf16.msra.mxu0 %v320
    %340 = vmatprep.subr.bf16.mxu0 0
    %341 = vmatpush1.bf16.msra.mxu0 %v319
    %342 = vmatprep.subr.bf16.mxu0 0
    %343 = vmatpush1.bf16.msra.mxu0 %v318
    %344 = vmatprep.subr.bf16.mxu0 0
    %345 = vmatpush1.bf16.msra.mxu0 %v317
    %346 = vmatprep.subr.bf16.mxu0 0
    %347 = vmatpush1.bf16.msra.mxu0 %v316
    %348 = vmatprep.subr.bf16.mxu0 0
    %349 = vmatpush2.bf16.msra.mxu0 0
    %350 = vmatprep.subr.bf16.mxu0 0
    %351 = vmatpush2.bf16.msra.mxu0 0
    %352 = vmatprep.subr.bf16.mxu0 0
    %353 = vmatpush2.bf16.msra.mxu0 0
    %354 = vmatprep.subr.bf16.mxu0 0
    %355 = vmatpush2.bf16.msra.mxu0 0
    %356 = vmatprep.subr.bf16.mxu0 0
    %357 = vmatpush2.bf16.msra.mxu0 0
    %358 = vmatprep.subr.bf16.mxu0 0
    %359 = vmatpush2.bf16.msra.mxu0 0
    %360 = vmatprep.subr.bf16.mxu0 0
    %361 = vmatpush2.bf16.msra.mxu0 0
    %362 = vmatprep.subr.bf16.mxu0 0
    %363 = vmatpush2.bf16.msra.mxu0 0
    %364 = vmatprep.mubr.bf16.mxu0 0
    %365 = vmatmul.mubr.bf16.gmra.mxu0 %v263
    %v366 = vpop.f32.mrf.mxu0
    %v367 = vadd.f32 %v283, %v366
    %v368 = vpop.f32.mrf.mxu0
    %v369 = vpop.f32.mrf.mxu0
    %v370 = vpop.f32.mrf.mxu0
    %371 = vdwg.mxu0
    %v372 = vlaneseq
    %v373 = vand.u32 %v372, 127
    %vm374 = vcmp.lt.s32.totalorder %v373, 8
    %v375 = vsel %vm374, %v367, -1e+30
    %376 = vmax.xlane.f32.xlu0 %v375
    %v377 = vpop.xlane.xlu0 %376
    %v378 = vsub.f32 %v375, %v377
    %v379 = vmul.f32 %v378, 1.442695
    %v380 = vpow.pop %v379
    %v381 = vsel %vm374, %v380, 0.0
    %382 = vadd.xlane.f32.xlu0 %v381
    %v383 = vpop.xlane.xlu0 %382
    %v384 = vrcp.pop %v383
    %v385 = vmul.f32 %v381, %v384
    %v386 = vmul.f32 %v381, %v378
    %387 = vadd.xlane.f32.xlu0 %v386
    %v388 = vpop.xlane.xlu0 %387
    %v389 = vlog2.pop %v383
    %v390 = vmul.f32 %v389, 0.6931472
    %v391 = vrcp.pop %v383
    %v392 = vmul.f32 %v388, %v391
    %v393 = vsub.f32 %v390, %v392
    %v394 = vpack.c.bf16 %v367, %v367
    %v395 = vunpack.c.l.bf16 %v394
    %v396 = vsub.f32 %v367, %v395
    %v397 = vpack.c.bf16 %v393, %v393
    %v398 = vunpack.c.l.bf16 %v397
    %v399 = vsub.f32 %v393, %v398
    %v400 = vsel %vm374, %v385, 0.0
    %vm401 = vcmp.eq.s32.totalorder %v373, 8
    %403 = vset.pattern.permute.xlu0 8
    %404 = vperm.xlu0 %403, %v395
    %v405 = vpop.permute.xlu0 %404
    %v407 = vsel %vm401, %v405, %v400
    %vm408 = vcmp.eq.s32.totalorder %v373, 9
    %410 = vset.pattern.permute.xlu0 8
    %411 = vperm.xlu0 %410, %v396
    %v412 = vpop.permute.xlu0 %411
    %v414 = vsel %vm408, %v412, %v407
    %vm415 = vcmp.eq.s32.totalorder %v373, 10
    %v416 = vsel %vm415, %v398, %v414
    %vm417 = vcmp.eq.s32.totalorder %v373, 11
    %v418 = vsel %vm417, %v399, %v416
    %v419 = vpack.c.bf16 %v418, %v418
    %420 = vst [vmem:[%s5] sm:$0xf] %v419
    // Predicated region
    $region42: #{_lambda_.1} parent=1 // pred_check
      _
    $region43: #{_lambda_.1} parent=1 // pred_check_branch
      %422 = sbr.rel (0) target = $region45
    $region44: #{_lambda_.1} parent=1 // pred_region
      _
    $region45: #{_lambda_.1} parent=1 // pred_fallthru
      _
    // Predicated region
    $region46: #{_lambda_.1} parent=1 // pred_check
      _
    $region47: #{_lambda_.1} parent=1 // pred_check_branch
      %424 = sbr.rel (0) target = $region49
    $region48: #{_lambda_.1} parent=1 // pred_region
      _
    $region49: #{_lambda_.1} parent=1 // pred_fallthru
      _
    %425 = vsyncpa [#allocation3], 1
    %426 = vsyncpa [#allocation5], 1
    %427 = vsyncpa [#allocation8], 1

</llo_original>
